<compile_context>
chip_gen: v5e
topology: v5e:2x2
jax: 0.10.0
libtpu: 0.0.40
codegen_flags: <defaults>
</compile_context>

<pallas_src>
import functools

import jax
import jax.numpy as jnp
import numpy as np
from jax.experimental import pallas as pl
from jax.experimental.pallas import tpu as pltpu


def _layernorm(x, eps=1e-5):
    mu = jnp.mean(x, axis=-1, keepdims=True)
    var = jnp.mean((x - mu) ** 2, axis=-1, keepdims=True)
    return (x - mu) * jax.lax.rsqrt(var + eps)


def _vmem_cap_bytes():
    """Per-core VMEM capacity minus headroom (v7x-safe cap)."""
    try:
        cap = int(pltpu.get_tpu_info().vmem_capacity_bytes)
    except Exception:
        cap = 64 * 2 ** 20  # conservative default (v7x per-TensorCore VMEM)
    return max(cap - 4 * 2 ** 20, 8 * 2 ** 20)


# --------------------------------------------------------------------------------------
# Call 1: LayerNorm(x) -> Q, K, V (bf16), full-width matmuls.
# --------------------------------------------------------------------------------------
def _qkv_kernel(x_ref, wq_ref, wk_ref, wv_ref, q_ref, k_ref, v_ref):
    f32, bf16 = jnp.float32, jnp.bfloat16
    xn = _layernorm(x_ref[0]).astype(bf16)                                   # (T, C)
    q_ref[0] = jnp.dot(xn, wq_ref[...], preferred_element_type=f32).astype(bf16)
    k_ref[0] = jnp.dot(xn, wk_ref[...], preferred_element_type=f32).astype(bf16)
    v_ref[0] = jnp.dot(xn, wv_ref[...], preferred_element_type=f32).astype(bf16)


# --------------------------------------------------------------------------------------
# Call 2: attention core (per-head loop), projection, residuals, LayerNorm, FFN.
# --------------------------------------------------------------------------------------
def _attn_ffn_kernel(x_ref, q_ref, k_ref, v_ref, wp_ref, w1_ref, b1_ref, w2_ref, b2_ref,
                     o_ref, y_sc, *, num_heads, head_dim):
    f32, bf16 = jnp.float32, jnp.bfloat16
    q = q_ref[0]                                    # (TQ, C) bf16, scale already folded
    k = k_ref[0]                                    # (N,  C) bf16
    v = v_ref[0]                                    # (N,  C) bf16

    # Per-head attention: static unrolled loop; only the QK^T / PV contractions are
    # d-wide (inherent). Softmax normalization is applied after the PV matmul.
    for h in range(num_heads):
        sl = slice(h * head_dim, (h + 1) * head_dim)
        s = jax.lax.dot_general(q[:, sl], k[:, sl], (((1,), (1,)), ((), ())),
                                preferred_element_type=f32)                  # (TQ, N)
        s = s - jnp.max(s, axis=-1, keepdims=True)
        p = jnp.exp(s)                                                       # unnormalized
        l = jnp.sum(p, axis=-1, keepdims=True)                               # (TQ, 1)
        oh = jnp.dot(p.astype(bf16), v[:, sl], preferred_element_type=f32)   # (TQ, d)
        oh = oh * pl.reciprocal(l, approx=True)                              # post-PV norm
        y_sc[:, sl] = oh.astype(bf16)

    # Output projection: one full-width (TQ, C) @ (C, C) matmul (head concat folded).
    y = jnp.dot(y_sc[...], wp_ref[...], preferred_element_type=f32)          # (TQ, C) f32

    # Residual -> LayerNorm -> FFN -> residual (from the post-norm tensor, per the spec).
    x1 = x_ref[0] + y
    x2 = _layernorm(x1)
    hdn = jnp.dot(x2.astype(bf16), w1_ref[...],
                  preferred_element_type=f32) + b1_ref[...]
    hdn = jax.nn.gelu(hdn, approximate=False)
    ffn = jnp.dot(hdn.astype(bf16), w2_ref[...],
                  preferred_element_type=f32) + b2_ref[...]
    o_ref[0] = (x2 + ffn).astype(o_ref.dtype)


def block_forward(x, wqkv, wproj, w1, b1, w2, b2, *, num_heads, q_tile=None):
    B, N, C = x.shape
    H = num_heads
    assert C % H == 0
    d = C // H
    Hf = w1.shape[1]
    bf16, f32 = jnp.bfloat16, jnp.float32

    # Query tile: default 128; sweep up to 256 on v6e (256-wide MXU), keep 128 on v5e.
    TQ = q_tile if q_tile is not None else min(N, 128)
    assert N % TQ == 0 and (TQ % 8 == 0 or TQ == N)
    NQ = N // TQ

    # Host-side weight prep: fold 1/sqrt(d) into W_q; cast matmul weights to bf16.
    scale = d ** (-0.5)
    wq = (wqkv[:, :C] * scale).astype(bf16)            # (C, C)
    wk = wqkv[:, C:2 * C].astype(bf16)                 # (C, C)
    wv = wqkv[:, 2 * C:].astype(bf16)                  # (C, C)
    wp = wproj.astype(bf16)                            # (C, C)
    w1b = w1.astype(bf16)                              # (C, Hf)
    w2b = w2.astype(bf16)                              # (Hf, C)
    b1f = b1.reshape(1, Hf).astype(f32)
    b2f = b2.reshape(1, C).astype(f32)

    vmem_cap = _vmem_cap_bytes()
    single = pl.Buffered(1)                            # constant-index blocks: 1 buffer

    # ---------------- Call 1: LN(x) -> Q/K/V ----------------
    # VMEM estimate: 2x only for blocks whose index map varies; +transients +margin.
    est_pro = (2 * TQ * C * 4                          # x tile (double-buffered)
               + 3 * C * C * 2                         # Wq/Wk/Wv (single-buffered)
               + 3 * 2 * TQ * C * 2                    # q/k/v output tiles
               + 4 * TQ * C * 4                        # LN / matmul transients
               + (2 << 20))                            # Mosaic internal scratch margin
    q, k, v = pl.pallas_call(
        _qkv_kernel,
        out_shape=tuple(jax.ShapeDtypeStruct((B, N, C), bf16) for _ in range(3)),
        grid_spec=pltpu.PrefetchScalarGridSpec(
            num_scalar_prefetch=0,
            grid=(B, NQ),
            in_specs=[
                pl.BlockSpec((1, TQ, C), lambda b, t: (b, t, 0)),
                pl.BlockSpec((C, C), lambda b, t: (0, 0), pipeline_mode=single),
                pl.BlockSpec((C, C), lambda b, t: (0, 0), pipeline_mode=single),
                pl.BlockSpec((C, C), lambda b, t: (0, 0), pipeline_mode=single),
            ],
            out_specs=[
                pl.BlockSpec((1, TQ, C), lambda b, t: (b, t, 0)),
                pl.BlockSpec((1, TQ, C), lambda b, t: (b, t, 0)),
                pl.BlockSpec((1, TQ, C), lambda b, t: (b, t, 0)),
            ],
        ),
        compiler_params=pltpu.CompilerParams(
            dimension_semantics=("parallel", "parallel"),
            vmem_limit_bytes=int(min(max(est_pro, 8 << 20), vmem_cap)),
        ),
    )(x, wq, wk, wv)

    # ---------------- Call 2: attention + projection + FFN ----------------
    est_main = (2 * TQ * C * 4                         # x tile
                + 2 * TQ * C * 2                       # Q tile
                + 2 * 2 * N * C * 2                    # K and V full-sequence blocks
                + 2 * TQ * C * 4                       # output tile
                + C * C * 2 + C * Hf * 2 + Hf * 4      # Wproj, W1, b1 (single-buffered)
                + Hf * C * 2 + C * 4                   # W2, b2 (single-buffered)
                + TQ * C * 2                           # head-output slab scratch
                + 2 * TQ * N * 4 + TQ * Hf * 4         # scores/exp + FFN hidden transients
                + 4 * TQ * C * 4                       # residual/LN/FFN transients
                + (2 << 20))                           # Mosaic internal scratch margin
    out = pl.pallas_call(
        functools.partial(_attn_ffn_kernel, num_heads=H, head_dim=d),
        out_shape=jax.ShapeDtypeStruct((B, N, C), x.dtype),
        grid_spec=pltpu.PrefetchScalarGridSpec(
            num_scalar_prefetch=0,
            grid=(B, NQ),
            in_specs=[
                pl.BlockSpec((1, TQ, C), lambda b, qi: (b, qi, 0)),   # x (residual)
                pl.BlockSpec((1, TQ, C), lambda b, qi: (b, qi, 0)),   # Q tile (bf16)
                pl.BlockSpec((1, N, C), lambda b, qi: (b, 0, 0)),     # K full seq (bf16)
                pl.BlockSpec((1, N, C), lambda b, qi: (b, 0, 0)),     # V full seq (bf16)
                pl.BlockSpec((C, C), lambda b, qi: (0, 0), pipeline_mode=single),   # Wproj
                pl.BlockSpec((C, Hf), lambda b, qi: (0, 0), pipeline_mode=single),  # W1
                pl.BlockSpec((1, Hf), lambda b, qi: (0, 0), pipeline_mode=single),  # b1
                pl.BlockSpec((Hf, C), lambda b, qi: (0, 0), pipeline_mode=single),  # W2
                pl.BlockSpec((1, C), lambda b, qi: (0, 0), pipeline_mode=single),   # b2
            ],
            out_specs=pl.BlockSpec((1, TQ, C), lambda b, qi: (b, qi, 0)),
            scratch_shapes=[pltpu.VMEM((TQ, C), bf16)],               # head-output slab
        ),
        compiler_params=pltpu.CompilerParams(
            dimension_semantics=("parallel", "parallel"),
            vmem_limit_bytes=int(min(max(est_main, 8 << 20), vmem_cap)),
        ),
    )(x, q, k, v, wp, w1b, b1f, w2b, b2f)
    return out


def block_reference(x, wqkv, wproj, w1, b1, w2, b2, *, num_heads):
    """Pure-JAX reference mirroring the kernel's bf16-operand / f32-accumulate math."""
    B, N, C = x.shape
    H = num_heads
    d = C // H
    bf16, f32 = jnp.bfloat16, jnp.float32
    scale = d ** (-0.5)

    wq = (wqkv[:, :C] * scale).astype(bf16)
    wk = wqkv[:, C:2 * C].astype(bf16)
    wv = wqkv[:, 2 * C:].astype(bf16)
    wp = wproj.astype(bf16)

    xn = _layernorm(x).astype(bf16)
    q = jnp.einsum('bnc,ck->bnk', xn, wq, preferred_element_type=f32).astype(bf16)
    k = jnp.einsum('bnc,ck->bnk', xn, wk, preferred_element_type=f32).astype(bf16)
    v = jnp.einsum('bnc,ck->bnk', xn, wv, preferred_element_type=f32).astype(bf16)
    qh = q.reshape(B, N, H, d).transpose(0, 2, 1, 3)
    kh = k.reshape(B, N, H, d).transpose(0, 2, 1, 3)
    vh = v.reshape(B, N, H, d).transpose(0, 2, 1, 3)
    s = jnp.einsum('bhid,bhjd->bhij', qh, kh, preferred_element_type=f32)
    s = s - jnp.max(s, axis=-1, keepdims=True)
    p = jnp.exp(s)
    o = jnp.einsum('bhij,bhjd->bhid', p.astype(bf16), vh, preferred_element_type=f32)
    o = o / jnp.sum(p, axis=-1, keepdims=True)
    y = o.transpose(0, 2, 1, 3).reshape(B, N, C).astype(bf16)
    y = jnp.einsum('bnc,ck->bnk', y, wp, preferred_element_type=f32)

    x1 = x + y
    x2 = _layernorm(x1)
    hdn = jnp.einsum('bnc,cf->bnf', x2.astype(bf16), w1.astype(bf16),
                     preferred_element_type=f32) + b1[0]
    hdn = jax.nn.gelu(hdn, approximate=False)
    ffn = jnp.einsum('bnf,fc->bnc', hdn.astype(bf16), w2.astype(bf16),
                     preferred_element_type=f32) + b2[0]
    return x2 + ffn


if __name__ == "__main__":
    # Small deterministic config (exercises batch and query-tile grid axes, H=4 heads).
    B, N, C = 2, 16, 32
    num_heads = 4            # head dim d = 8
    Hf = 64                  # FFN hidden dim

    key = jax.random.PRNGKey(0)
    kx, k1, k2, k3, k4, k5, k6 = jax.random.split(key, 7)

    x = jax.random.normal(kx, (B, N, C), dtype=jnp.float32)
    wqkv = 0.05 * jax.random.normal(k1, (C, 3 * C), dtype=jnp.float32)
    wproj = 0.05 * jax.random.normal(k2, (C, C), dtype=jnp.float32)
    w1 = 0.05 * jax.random.normal(k3, (C, Hf), dtype=jnp.float32)
    b1 = 0.05 * jax.random.normal(k5, (1, Hf), dtype=jnp.float32)
    w2 = 0.05 * jax.random.normal(k4, (Hf, C), dtype=jnp.float32)
    b2 = 0.05 * jax.random.normal(k6, (1, C), dtype=jnp.float32)

    out = block_forward(x, wqkv, wproj, w1, b1, w2, b2,
                        num_heads=num_heads, q_tile=8)
    out = jax.block_until_ready(out)

    ref = block_reference(x, wqkv, wproj, w1, b1, w2, b2, num_heads=num_heads)
    np.testing.assert_allclose(np.asarray(out, dtype=np.float32),
                               np.asarray(ref, dtype=np.float32),
                               atol=1e-2, rtol=1e-2)
    print("KERNEL_OK")
</pallas_src>

<mosaic_0001>
module attributes {stable_mosaic.version = 11 : i64} {
  func.func @_qkv_kernel(%arg0: i32, %arg1: i32, %arg2: memref<1x8x32xf32, #tpu.memory_space<vmem>>, %arg3: memref<32x32xbf16, #tpu.memory_space<vmem>>, %arg4: memref<32x32xbf16, #tpu.memory_space<vmem>>, %arg5: memref<32x32xbf16, #tpu.memory_space<vmem>>, %arg6: memref<1x8x32xbf16, #tpu.memory_space<vmem>>, %arg7: memref<1x8x32xbf16, #tpu.memory_space<vmem>>, %arg8: memref<1x8x32xbf16, #tpu.memory_space<vmem>>) attributes {dimension_semantics = [#tpu.dimension_semantics<parallel>, #tpu.dimension_semantics<parallel>], iteration_bounds = array<i64: 2, 2>, scalar_prefetch = 0 : i64, scratch_operands = 0 : i64, tpu.core_type = #tpu.core_type<tc>, window_params = [{transform_indices = @transform_0, window_bounds = array<i64: 1, 8, 32>}, {pipeline_mode = #tpu.pipeline_mode<synchronous>, transform_indices = @transform_1, window_bounds = array<i64: 32, 32>}, {pipeline_mode = #tpu.pipeline_mode<synchronous>, transform_indices = @transform_2, window_bounds = array<i64: 32, 32>}, {pipeline_mode = #tpu.pipeline_mode<synchronous>, transform_indices = @transform_3, window_bounds = array<i64: 32, 32>}, {transform_indices = @transform_4, window_bounds = array<i64: 1, 8, 32>}, {transform_indices = @transform_5, window_bounds = array<i64: 1, 8, 32>}, {transform_indices = @transform_6, window_bounds = array<i64: 1, 8, 32>}]} {
    %c0 = arith.constant 0 : index
    %c0_0 = arith.constant 0 : index
    %c0_1 = arith.constant 0 : index
    %0 = vector.load %arg2[%c0, %c0_0, %c0_1] : memref<1x8x32xf32, #tpu.memory_space<vmem>>, vector<1x8x32xf32>
    %1 = vector.shape_cast %0 : vector<1x8x32xf32> to vector<8x32xf32>
    %cst = arith.constant dense<0.000000e+00> : vector<8xf32>
    %2 = vector.multi_reduction <add>, %1, %cst [1] : vector<8x32xf32> to vector<8xf32>
    %3 = vector.shape_cast %2 : vector<8xf32> to vector<8x1xf32>
    %cst_2 = arith.constant 3.200000e+01 : f32
    %4 = vector.broadcast %cst_2 : f32 to vector<8x1xf32>
    %5 = arith.divf %3, %4 : vector<8x1xf32>
    %6 = vector.broadcast %5 : vector<8x1xf32> to vector<8x32xf32>
    %7 = arith.subf %1, %6 : vector<8x32xf32>
    %8 = arith.mulf %7, %7 : vector<8x32xf32>
    %cst_3 = arith.constant dense<0.000000e+00> : vector<8xf32>
    %9 = vector.multi_reduction <add>, %8, %cst_3 [1] : vector<8x32xf32> to vector<8xf32>
    %10 = vector.shape_cast %9 : vector<8xf32> to vector<8x1xf32>
    %cst_4 = arith.constant 3.200000e+01 : f32
    %11 = vector.broadcast %cst_4 : f32 to vector<8x1xf32>
    %12 = arith.divf %10, %11 : vector<8x1xf32>
    %13 = vector.broadcast %5 : vector<8x1xf32> to vector<8x32xf32>
    %14 = arith.subf %1, %13 : vector<8x32xf32>
    %cst_5 = arith.constant 9.99999974E-6 : f32
    %15 = vector.broadcast %cst_5 : f32 to vector<8x1xf32>
    %16 = arith.addf %12, %15 : vector<8x1xf32>
    %17 = math.rsqrt %16 : vector<8x1xf32>
    %18 = vector.broadcast %17 : vector<8x1xf32> to vector<8x32xf32>
    %19 = arith.mulf %14, %18 : vector<8x32xf32>
    %20 = arith.truncf %19 : vector<8x32xf32> to vector<8x32xbf16>
    %c0_6 = arith.constant 0 : index
    %c0_7 = arith.constant 0 : index
    %21 = vector.load %arg3[%c0_6, %c0_7] : memref<32x32xbf16, #tpu.memory_space<vmem>>, vector<32x32xbf16>
    %cst_8 = arith.constant dense<0.000000e+00> : vector<8x32xf32>
    %22 = tpu.matmul %20, %21, %cst_8 {dimension_numbers = #tpu.dot_dimension_numbers<[1], [0], [0], [1], [0, 0, 1, 1], [], []>} : vector<8x32xbf16>, vector<32x32xbf16>, vector<8x32xf32> -> vector<8x32xf32>
    %23 = arith.truncf %22 : vector<8x32xf32> to vector<8x32xbf16>
    %c0_9 = arith.constant 0 : index
    %c0_10 = arith.constant 0 : index
    %c0_11 = arith.constant 0 : index
    %24 = vector.load %arg6[%c0_9, %c0_10, %c0_11] : memref<1x8x32xbf16, #tpu.memory_space<vmem>>, vector<1x8x32xbf16>
    %25 = vector.shape_cast %24 : vector<1x8x32xbf16> to vector<8x32xbf16>
    %26 = vector.shape_cast %23 : vector<8x32xbf16> to vector<1x8x32xbf16>
    tpu.vector_store %arg6[%c0_9, %c0_10, %c0_11], %26 {strides = array<i32>} : memref<1x8x32xbf16, #tpu.memory_space<vmem>>, vector<1x8x32xbf16>,
    %c0_12 = arith.constant 0 : index
    %c0_13 = arith.constant 0 : index
    %27 = vector.load %arg4[%c0_12, %c0_13] : memref<32x32xbf16, #tpu.memory_space<vmem>>, vector<32x32xbf16>
    %cst_14 = arith.constant dense<0.000000e+00> : vector<8x32xf32>
    %28 = tpu.matmul %20, %27, %cst_14 {dimension_numbers = #tpu.dot_dimension_numbers<[1], [0], [0], [1], [0, 0, 1, 1], [], []>} : vector<8x32xbf16>, vector<32x32xbf16>, vector<8x32xf32> -> vector<8x32xf32>
    %29 = arith.truncf %28 : vector<8x32xf32> to vector<8x32xbf16>
    %c0_15 = arith.constant 0 : index
    %c0_16 = arith.constant 0 : index
    %c0_17 = arith.constant 0 : index
    %30 = vector.load %arg7[%c0_15, %c0_16, %c0_17] : memref<1x8x32xbf16, #tpu.memory_space<vmem>>, vector<1x8x32xbf16>
    %31 = vector.shape_cast %30 : vector<1x8x32xbf16> to vector<8x32xbf16>
    %32 = vector.shape_cast %29 : vector<8x32xbf16> to vector<1x8x32xbf16>
    tpu.vector_store %arg7[%c0_15, %c0_16, %c0_17], %32 {strides = array<i32>} : memref<1x8x32xbf16, #tpu.memory_space<vmem>>, vector<1x8x32xbf16>,
    %c0_18 = arith.constant 0 : index
    %c0_19 = arith.constant 0 : index
    %33 = vector.load %arg5[%c0_18, %c0_19] : memref<32x32xbf16, #tpu.memory_space<vmem>>, vector<32x32xbf16>
    %cst_20 = arith.constant dense<0.000000e+00> : vector<8x32xf32>
    %34 = tpu.matmul %20, %33, %cst_20 {dimension_numbers = #tpu.dot_dimension_numbers<[1], [0], [0], [1], [0, 0, 1, 1], [], []>} : vector<8x32xbf16>, vector<32x32xbf16>, vector<8x32xf32> -> vector<8x32xf32>
    %35 = arith.truncf %34 : vector<8x32xf32> to vector<8x32xbf16>
    %c0_21 = arith.constant 0 : index
    %c0_22 = arith.constant 0 : index
    %c0_23 = arith.constant 0 : index
    %36 = vector.load %arg8[%c0_21, %c0_22, %c0_23] : memref<1x8x32xbf16, #tpu.memory_space<vmem>>, vector<1x8x32xbf16>
    %37 = vector.shape_cast %36 : vector<1x8x32xbf16> to vector<8x32xbf16>
    %38 = vector.shape_cast %35 : vector<8x32xbf16> to vector<1x8x32xbf16>
    tpu.vector_store %arg8[%c0_21, %c0_22, %c0_23], %38 {strides = array<i32>} : memref<1x8x32xbf16, #tpu.memory_space<vmem>>, vector<1x8x32xbf16>,
    return
  }
  func.func @transform_0(%arg0: i32, %arg1: i32) -> (i32, i32, i32) {
    %c0_i32 = arith.constant 0 : i32
    %c0_i32_0 = arith.constant 0 : i32
    return %arg0, %arg1, %c0_i32 : i32, i32, i32
  }
  func.func @transform_1(%arg0: i32, %arg1: i32) -> (i32, i32) {
    %c0_i32 = arith.constant 0 : i32
    %c0_i32_0 = arith.constant 0 : i32
    %c0_i32_1 = arith.constant 0 : i32
    return %c0_i32, %c0_i32_0 : i32, i32
  }
  func.func @transform_2(%arg0: i32, %arg1: i32) -> (i32, i32) {
    %c0_i32 = arith.constant 0 : i32
    %c0_i32_0 = arith.constant 0 : i32
    %c0_i32_1 = arith.constant 0 : i32
    return %c0_i32, %c0_i32_0 : i32, i32
  }
  func.func @transform_3(%arg0: i32, %arg1: i32) -> (i32, i32) {
    %c0_i32 = arith.constant 0 : i32
    %c0_i32_0 = arith.constant 0 : i32
    %c0_i32_1 = arith.constant 0 : i32
    return %c0_i32, %c0_i32_0 : i32, i32
  }
  func.func @transform_4(%arg0: i32, %arg1: i32) -> (i32, i32, i32) {
    %c0_i32 = arith.constant 0 : i32
    %c0_i32_0 = arith.constant 0 : i32
    return %arg0, %arg1, %c0_i32 : i32, i32, i32
  }
  func.func @transform_5(%arg0: i32, %arg1: i32) -> (i32, i32, i32) {
    %c0_i32 = arith.constant 0 : i32
    %c0_i32_0 = arith.constant 0 : i32
    return %arg0, %arg1, %c0_i32 : i32, i32, i32
  }
  func.func @transform_6(%arg0: i32, %arg1: i32) -> (i32, i32, i32) {
    %c0_i32 = arith.constant 0 : i32
    %c0_i32_0 = arith.constant 0 : i32
    return %arg0, %arg1, %c0_i32 : i32, i32, i32
  }
}

</mosaic_0001>

<llo_original>
// kernel: tpu_custom_call.1
$region0: #{tpu_custom_call.1}
  #allocation0 [shape = 'u32[]', space=smem, size = 0x4, offset = 0x4, fixed_abs, tag = 'smem constant byte address 0x4 - core index']
  #allocation1 [shape = 'u32[72,128]{1,0:T(1,128)}', space=vmem, size = 0x9000, scoped, tag = 'internal scratch']
  %s0 = inlined_call_operand.hbm [shape: f32[2,16,32], index: 0, kind: input, shape index: {}]
  %s1 = inlined_call_operand.hbm [shape: bf16[32,32], index: 1, kind: input, shape index: {}]
  %s2 = inlined_call_operand.hbm [shape: bf16[32,32], index: 2, kind: input, shape index: {}]
  %s3 = inlined_call_operand.hbm [shape: bf16[32,32], index: 3, kind: input, shape index: {}]
  %s4 = inlined_call_operand.hbm [shape: bf16[2,16,32], index: 4, kind: output, shape index: {0}]
  %s5 = inlined_call_operand.hbm [shape: bf16[2,16,32], index: 5, kind: output, shape index: {1}]
  %s6 = inlined_call_operand.hbm [shape: bf16[2,16,32], index: 6, kind: output, shape index: {2}]
  %7 = xla_tuple %s4, %s5, %s6
  %s8 = sld [smem:[#allocation0]]
  $region81: #{tpu_custom_call.1} parent=0
    _
  %s10 = ssub.s32 1, %s8
  %s11 = scalar_select 0, %s10, %s8
  $region1: #{tpu_custom_call.1} parent=0
    #allocation2 [shape = 'u8[8192]{0}', space=vmem, size = 0x2000, scoped, tag = 'input window, operand 0']
    #allocation3 [shape = 's32[2]{0}', space=sflag, size = 0x8, scoped, tag = 'scoped memory for tpu_custom_call.1']
    #allocation4 [shape = 's32[2]{0}', space=sflag, size = 0x8, scoped, tag = 'scoped memory for tpu_custom_call.1']
    #allocation5 [shape = 'u8[8192]{0}', space=vmem, size = 0x2000, scoped, tag = 'input window, operand 1, single buffered']
    #allocation6 [shape = 's32[1]{0}', space=sflag, size = 0x4, scoped, tag = 'scoped memory for tpu_custom_call.1']
    #allocation7 [shape = 'u8[8192]{0}', space=vmem, size = 0x2000, scoped, tag = 'input window, operand 2, single buffered']
    #allocation8 [shape = 'u8[8192]{0}', space=vmem, size = 0x2000, scoped, tag = 'input window, operand 3, single buffered']
    #allocation9 [shape = 's32[1]{0}', space=sflag, size = 0x4, scoped, tag = 'scoped memory for tpu_custom_call.1']
    #allocation10 [shape = 'u8[4096]{0}', space=vmem, size = 0x1000, scoped, tag = 'output window, operand 0']
    #allocation11 [shape = 'u8[4096]{0}', space=vmem, size = 0x1000, scoped, tag = 'output window, operand 1']
    #allocation12 [shape = 's32[2]{0}', space=sflag, size = 0x8, scoped, tag = 'scoped memory for tpu_custom_call.1']
    #allocation13 [shape = 'u8[4096]{0}', space=vmem, size = 0x1000, scoped, tag = 'output window, operand 2']
    %12 = vsyncpa [#allocation3], 0
    %s13 = scalar_lea.sflag [#allocation3], 1
    %14 = vsyncpa %s13, 0
    %15 = vsyncpa [#allocation6], 0
    %16 = vsyncpa [#allocation9], 0
    %17 = vsyncpa [#allocation4], 0
    %s18 = scalar_lea.sflag [#allocation4], 1
    %19 = vsyncpa %s18, 0
    %20 = vsyncpa [#allocation12], 0
    %s21 = scalar_lea.sflag [#allocation12], 1
    %22 = vsyncpa %s21, 0
    loop: start=0, step=1, limit=6
    $region2: #{tpu_custom_call.1} parent=1 // loop_pre_header
      _
    $region3: #{tpu_custom_call.1} parent=1 // loop_header
      %s24 = sphi 0, %s28
      %p25 = scmp.ge.s32.totalorder %s24, 6
      %s31 = sphi 0, %s43
      %s32 = sphi 0, %s39
      %s33 = sphi 0, %s31
      %s34 = sphi 0, %s32
      %s35 = sphi 0, %s33
      %s36 = sphi 0, %s34
      %s48 = sphi 0, %s50
      %s51 = sphi 0, %s48
      %s52 = sphi 0, %s51
      %s68 = sphi 0, %s52
      %s72 = sphi 0, %s72
      %s74 = sphi 0, %s72
      %s75 = sphi 0, %s74
      %s89 = sphi 0, %s75
      %s93 = sphi 0, %s93
      %s95 = sphi 0, %s93
      %s96 = sphi 0, %s95
      %s110 = sphi 0, %s96
      %s114 = sphi 0, %s114
      %s116 = sphi 0, %s114
      %s117 = sphi 0, %s116
      %s131 = sphi 0, %s117
      %s139 = sphi 0, %s141
      %s142 = sphi 0, %s139
      %s143 = sphi 0, %s142
      %s159 = sphi 0, %s143
      %s167 = sphi 0, %s169
      %s170 = sphi 0, %s167
      %s171 = sphi 0, %s170
      %s187 = sphi 0, %s171
      %s195 = sphi 0, %s197
      %s198 = sphi 0, %s195
      %s199 = sphi 0, %s198
      %s215 = sphi 0, %s199
    $region4: #{tpu_custom_call.1} parent=1 // loop_header_branch
      %27 = sbr.rel (%p25) target = $region8
    $region5: #{tpu_custom_call.1} parent=1 // loop_body
      %s29 = ssub.s32 %s24, 1
      %s30 = ssub.s32 %s24, 2
      %s37 = sadd.s32 1, %s32
      %p38 = scmp.ge.s32.totalorder %s37, 2
      %s39 = scalar_select %p38, 0, %s37
      %s40 = sadd.s32 1, %s31
      %s41 = scalar_select %p38, %s40, %s31
      %p42 = scmp.ge.s32.totalorder %s41, 2
      %s43 = scalar_select %p42, 0, %s41
      %s44 = ssub.s32 %s31, %s43
      %s45 = ssub.s32 %s32, %s39
      %s46 = sor.u32 %s44, %s45
      %p47 = scmp.eq.s32.totalorder %s46, 0
      %s49 = sadd.s32 %s48, 1
      %s50 = scalar_select %p47, %s48, %s49
      %p53 = pneg %p47
      %p54 = scmp.eq.s32.totalorder %s24, 3
      %p55 = por %p53, %p54
      %p56 = scmp.ne.s32.totalorder %s48, %s51
      %p57 = scmp.eq.s32.totalorder %s24, 0
      %p58 = por %p56, %p57
      %p59 = scmp.ne.s32.totalorder %s48, %s51
      %p60 = scmp.eq.s32.totalorder %s29, 3
      %p61 = por %p59, %p60
      %p62 = scmp.ne.s32.totalorder %s51, %s52
      %p63 = scmp.eq.s32.totalorder %s29, 0
      %p64 = por %p62, %p63
      %p65 = scmp.ne.s32.totalorder %s51, %s52
      %p66 = scmp.eq.s32.totalorder %s30, 3
      %p67 = por %p65, %p66
      %p69 = scmp.ne.s32.totalorder %s52, %s68
      %p70 = scmp.eq.s32.totalorder %s30, 0
      %p71 = por %p69, %p70
      %s73 = sadd.s32 %s72, 1
      %p76 = scmp.eq.s32.totalorder %s24, 3
      %p77 = scmp.ne.s32.totalorder %s72, %s74
      %p78 = scmp.eq.s32.totalorder %s24, 0
      %p79 = por %p77, %p78
      %p80 = scmp.ne.s32.totalorder %s72, %s74
      %p81 = scmp.eq.s32.totalorder %s29, 3
      %p82 = por %p80, %p81
      %p83 = scmp.ne.s32.totalorder %s74, %s75
      %p84 = scmp.eq.s32.totalorder %s29, 0
      %p85 = por %p83, %p84
      %p86 = scmp.ne.s32.totalorder %s74, %s75
      %p87 = scmp.eq.s32.totalorder %s30, 3
      %p88 = por %p86, %p87
      %p90 = scmp.ne.s32.totalorder %s75, %s89
      %p91 = scmp.eq.s32.totalorder %s30, 0
      %p92 = por %p90, %p91
      %s94 = sadd.s32 %s93, 1
      %p97 = scmp.eq.s32.totalorder %s24, 3
      %p98 = scmp.ne.s32.totalorder %s93, %s95
      %p99 = scmp.eq.s32.totalorder %s24, 0
      %p100 = por %p98, %p99
      %p101 = scmp.ne.s32.totalorder %s93, %s95
      %p102 = scmp.eq.s32.totalorder %s29, 3
      %p103 = por %p101, %p102
      %p104 = scmp.ne.s32.totalorder %s95, %s96
      %p105 = scmp.eq.s32.totalorder %s29, 0
      %p106 = por %p104, %p105
      %p107 = scmp.ne.s32.totalorder %s95, %s96
      %p108 = scmp.eq.s32.totalorder %s30, 3
      %p109 = por %p107, %p108
      %p111 = scmp.ne.s32.totalorder %s96, %s110
      %p112 = scmp.eq.s32.totalorder %s30, 0
      %p113 = por %p111, %p112
      %s115 = sadd.s32 %s114, 1
      %p118 = scmp.eq.s32.totalorder %s24, 3
      %p119 = scmp.ne.s32.totalorder %s114, %s116
      %p120 = scmp.eq.s32.totalorder %s24, 0
      %p121 = por %p119, %p120
      %p122 = scmp.ne.s32.totalorder %s114, %s116
      %p123 = scmp.eq.s32.totalorder %s29, 3
      %p124 = por %p122, %p123
      %p125 = scmp.ne.s32.totalorder %s116, %s117
      %p126 = scmp.eq.s32.totalorder %s29, 0
      %p127 = por %p125, %p126
      %p128 = scmp.ne.s32.totalorder %s116, %s117
      %p129 = scmp.eq.s32.totalorder %s30, 3
      %p130 = por %p128, %p129
      %p132 = scmp.ne.s32.totalorder %s117, %s131
      %p133 = scmp.eq.s32.totalorder %s30, 0
      %p134 = por %p132, %p133
      %s135 = ssub.s32 %s31, %s43
      %s136 = ssub.s32 %s32, %s39
      %s137 = sor.u32 %s135, %s136
      %p138 = scmp.eq.s32.totalorder %s137, 0
      %s140 = sadd.s32 %s139, 1
      %s141 = scalar_select %p138, %s139, %s140
      %p144 = pneg %p138
      %p145 = scmp.eq.s32.totalorder %s24, 3
      %p146 = por %p144, %p145
      %p147 = scmp.ne.s32.totalorder %s139, %s142
      %p148 = scmp.eq.s32.totalorder %s24, 0
      %p149 = por %p147, %p148
      %p150 = scmp.ne.s32.totalorder %s139, %s142
      %p151 = scmp.eq.s32.totalorder %s29, 3
      %p152 = por %p150, %p151
      %p153 = scmp.ne.s32.totalorder %s142, %s143
      %p154 = scmp.eq.s32.totalorder %s29, 0
      %p155 = por %p153, %p154
      %p156 = scmp.ne.s32.totalorder %s142, %s143
      %p157 = scmp.eq.s32.totalorder %s30, 3
      %p158 = por %p156, %p157
      %p160 = scmp.ne.s32.totalorder %s143, %s159
      %p161 = scmp.eq.s32.totalorder %s30, 0
      %p162 = por %p160, %p161
      %s163 = ssub.s32 %s31, %s43
      %s164 = ssub.s32 %s32, %s39
      %s165 = sor.u32 %s163, %s164
      %p166 = scmp.eq.s32.totalorder %s165, 0
      %s168 = sadd.s32 %s167, 1
      %s169 = scalar_select %p166, %s167, %s168
      %p172 = pneg %p166
      %p173 = scmp.eq.s32.totalorder %s24, 3
      %p174 = por %p172, %p173
      %p175 = scmp.ne.s32.totalorder %s167, %s170
      %p176 = scmp.eq.s32.totalorder %s24, 0
      %p177 = por %p175, %p176
      %p178 = scmp.ne.s32.totalorder %s167, %s170
      %p179 = scmp.eq.s32.totalorder %s29, 3
      %p180 = por %p178, %p179
      %p181 = scmp.ne.s32.totalorder %s170, %s171
      %p182 = scmp.eq.s32.totalorder %s29, 0
      %p183 = por %p181, %p182
      %p184 = scmp.ne.s32.totalorder %s170, %s171
      %p185 = scmp.eq.s32.totalorder %s30, 3
      %p186 = por %p184, %p185
      %p188 = scmp.ne.s32.totalorder %s171, %s187
      %p189 = scmp.eq.s32.totalorder %s30, 0
      %p190 = por %p188, %p189
      %s191 = ssub.s32 %s31, %s43
      %s192 = ssub.s32 %s32, %s39
      %s193 = sor.u32 %s191, %s192
      %p194 = scmp.eq.s32.totalorder %s193, 0
      %s196 = sadd.s32 %s195, 1
      %s197 = scalar_select %p194, %s195, %s196
      %p200 = pneg %p194
      %p201 = scmp.eq.s32.totalorder %s24, 3
      %p202 = por %p200, %p201
      %p203 = scmp.ne.s32.totalorder %s195, %s198
      %p204 = scmp.eq.s32.totalorder %s24, 0
      %p205 = por %p203, %p204
      %p206 = scmp.ne.s32.totalorder %s195, %s198
      %p207 = scmp.eq.s32.totalorder %s29, 3
      %p208 = por %p206, %p207
      %p209 = scmp.ne.s32.totalorder %s198, %s199
      %p210 = scmp.eq.s32.totalorder %s29, 0
      %p211 = por %p209, %p210
      %p212 = scmp.ne.s32.totalorder %s198, %s199
      %p213 = scmp.eq.s32.totalorder %s30, 3
      %p214 = por %p212, %p213
      %p216 = scmp.ne.s32.totalorder %s199, %s215
      %p217 = scmp.eq.s32.totalorder %s30, 0
      %p218 = por %p216, %p217
      %p219 = scmp.le.s32.totalorder 1, %s24
      %p220 = scmp.lt.s32.totalorder %s24, 5
      %p221 = pnand %p219, %p220
      %p222 = pneg %p221
      // Predicated region
      $region9: #{tpu_custom_call.1} parent=5 // pred_check
        _
      $region10: #{tpu_custom_call.1} parent=5 // pred_check_branch
        %224 = sbr.rel (%p221) target = $region12
      $region11: #{tpu_custom_call.1} parent=5 // pred_region
        %s225 = ssub.s32 %s24, 1
        // Predicated region
        $region13: #{tpu_custom_call.1} parent=11 // pred_check
          %p226 = pneg %p85
        $region14: #{tpu_custom_call.1} parent=11 // pred_check_branch
          %228 = sbr.rel (%p226) target = $region16
        $region15: #{tpu_custom_call.1} parent=11 // pred_region
          %230 = vsyncadd [#allocation6], 0
          %s231 = sshll.u32 %s1, 4
          %s232 = int_to_ptr.hbm [resolvable:$true] %s231
          %s233 = sshll.u32 [#allocation5], 4
          %s234 = int_to_ptr.vmem [resolvable:$true] %s233
          %239 = dma.hbm_to_vmem [thread:$0]  %s232, 256, %s234, [#allocation6], 64, 64, 4
        $region16: #{tpu_custom_call.1} parent=11 // pred_fallthru
          _
        // Predicated region
        $region17: #{tpu_custom_call.1} parent=11 // pred_check
          %p240 = pneg %p106
        $region18: #{tpu_custom_call.1} parent=11 // pred_check_branch
          %242 = sbr.rel (%p240) target = $region20
        $region19: #{tpu_custom_call.1} parent=11 // pred_region
          %244 = vsyncadd [#allocation6], 0
          %s245 = sshll.u32 %s2, 4
          %s246 = int_to_ptr.hbm [resolvable:$true] %s245
          %s247 = sshll.u32 [#allocation7], 4
          %s248 = int_to_ptr.vmem [resolvable:$true] %s247
          %253 = dma.hbm_to_vmem [thread:$0]  %s246, 256, %s248, [#allocation6], 64, 64, 4
        $region20: #{tpu_custom_call.1} parent=11 // pred_fallthru
          _
        // Predicated region
        $region21: #{tpu_custom_call.1} parent=11 // pred_check
          %p254 = pneg %p127
        $region22: #{tpu_custom_call.1} parent=11 // pred_check_branch
          %256 = sbr.rel (%p254) target = $region24
        $region23: #{tpu_custom_call.1} parent=11 // pred_region
          %258 = vsyncadd [#allocation9], 0
          %s259 = sshll.u32 %s3, 4
          %s260 = int_to_ptr.hbm [resolvable:$true] %s259
          %s261 = sshll.u32 [#allocation8], 4
          %s262 = int_to_ptr.vmem [resolvable:$true] %s261
          %267 = dma.hbm_to_vmem [thread:$0]  %s260, 256, %s262, [#allocation9], 64, 64, 4
        $region24: #{tpu_custom_call.1} parent=11 // pred_fallthru
          _
      $region12: #{tpu_custom_call.1} parent=5 // pred_fallthru
        _
      %p268 = scmp.lt.s32.totalorder %s24, 4
      // Predicated region
      $region25: #{tpu_custom_call.1} parent=5 // pred_check
        %p269 = pneg %p268
      $region26: #{tpu_custom_call.1} parent=5 // pred_check_branch
        %271 = sbr.rel (%p269) target = $region28
      $region27: #{tpu_custom_call.1} parent=5 // pred_region
        // Predicated region
        $region29: #{tpu_custom_call.1} parent=27 // pred_check
          %p272 = pneg %p58
        $region30: #{tpu_custom_call.1} parent=27 // pred_check_branch
          %274 = sbr.rel (%p272) target = $region32
        $region31: #{tpu_custom_call.1} parent=27 // pred_region
          %s275 = sand.u32 %s48, 1
          %s276 = scalar_lea.sflag [#allocation3], %s275
          %s277 = sand.u32 %s48, 1
          %s278 = smul.addr %s277, 8
          %s279 = scalar_lea.vmem [#allocation2], %s278
          %281 = vsyncadd %s276, 0
          %s282 = smul.addr %s31, 2
          %s283 = sadd.s32 %s32, %s282
          %s284 = smul.addr %s283, 8
          %s285 = scalar_lea.hbm %s0, %s284
          %s287 = sshll.u32 %s285, 4
          %s288 = int_to_ptr.hbm [resolvable:$true] %s287
          %s289 = sshll.u32 %s279, 4
          %s290 = int_to_ptr.vmem [resolvable:$true] %s289
          %292 = dma.hbm_to_vmem [thread:$0]  %s288, 128, %s290, %s276
        $region32: #{tpu_custom_call.1} parent=27 // pred_fallthru
          _
      $region28: #{tpu_custom_call.1} parent=5 // pred_fallthru
        _
      %p293 = scmp.le.s32.totalorder 1, %s24
      %p294 = scmp.lt.s32.totalorder %s24, 5
      %p295 = pnand %p293, %p294
      %p296 = pneg %p295
      // Predicated region
      $region33: #{tpu_custom_call.1} parent=5 // pred_check
        _
      $region34: #{tpu_custom_call.1} parent=5 // pred_check_branch
        %298 = sbr.rel (%p295) target = $region36
      $region35: #{tpu_custom_call.1} parent=5 // pred_region
        %s299 = ssub.s32 %s24, 1
        %s300 = sand.u32 %s51, 1
        %s301 = scalar_lea.sflag [#allocation3], %s300
        %s302 = sand.u32 %s51, 1
        %s303 = smul.addr %s302, 8
        %s304 = scalar_lea.vmem [#allocation2], %s303
        // Predicated region
        $region37: #{tpu_custom_call.1} parent=35 // pred_check
          %p305 = pneg %p64
        $region38: #{tpu_custom_call.1} parent=35 // pred_check_branch
          %307 = sbr.rel (%p305) target = $region40
        $region39: #{tpu_custom_call.1} parent=35 // pred_region
          %309 = dma.done %s301, 128
        $region40: #{tpu_custom_call.1} parent=35 // pred_fallthru
          _
        // Predicated region
        $region41: #{tpu_custom_call.1} parent=35 // pred_check
          %p310 = pneg %p85
        $region42: #{tpu_custom_call.1} parent=35 // pred_check_branch
          %312 = sbr.rel (%p310) target = $region44
        $region43: #{tpu_custom_call.1} parent=35 // pred_region
          %314 = dma.done [#allocation6], 256
        $region44: #{tpu_custom_call.1} parent=35 // pred_fallthru
          _
        // Predicated region
        $region45: #{tpu_custom_call.1} parent=35 // pred_check
          %p315 = pneg %p106
        $region46: #{tpu_custom_call.1} parent=35 // pred_check_branch
          %317 = sbr.rel (%p315) target = $region48
        $region47: #{tpu_custom_call.1} parent=35 // pred_region
          %319 = dma.done [#allocation6], 256
        $region48: #{tpu_custom_call.1} parent=35 // pred_fallthru
          _
        // Predicated region
        $region49: #{tpu_custom_call.1} parent=35 // pred_check
          %p320 = pneg %p127
        $region50: #{tpu_custom_call.1} parent=35 // pred_check_branch
          %322 = sbr.rel (%p320) target = $region52
        $region51: #{tpu_custom_call.1} parent=35 // pred_region
          %324 = dma.done [#allocation9], 256
        $region52: #{tpu_custom_call.1} parent=35 // pred_fallthru
          _
        %s325 = sand.u32 %s51, 1
        %s326 = scalar_lea.sflag [#allocation3], %s325
        %s327 = sand.u32 %s51, 1
        %s328 = smul.addr %s327, 8
        %s329 = scalar_lea.vmem [#allocation2], %s328
        %p330 = pneg %p64
        %p331 = pneg %p61
        %p332 = pneg %p85
        %p333 = pneg %p82
        %p334 = pneg %p106
        %p335 = pneg %p103
        %p336 = pneg %p127
        %p337 = pneg %p124
        %p338 = pneg %p155
        %p339 = pneg %p152
        %s340 = sand.u32 %s142, 1
        %s341 = scalar_lea.sflag [#allocation4], %s340
        %s342 = sand.u32 %s142, 1
        %s343 = smul.addr %s342, 4
        %s344 = scalar_lea.vmem [#allocation10], %s343
        %p345 = pneg %p183
        %p346 = pneg %p180
        %s347 = sand.u32 %s29, 1
        %s348 = scalar_lea.sflag [#allocation12], %s347
        %s349 = sand.u32 %s170, 1
        %s350 = smul.addr %s349, 4
        %s351 = scalar_lea.vmem [#allocation11], %s350
        %p352 = pneg %p211
        %p353 = pneg %p208
        %s354 = sand.u32 %s29, 1
        %s355 = scalar_lea.sflag [#allocation12], %s354
        %s356 = sand.u32 %s198, 1
        %s357 = smul.addr %s356, 4
        %s358 = scalar_lea.vmem [#allocation13], %s357
        %v360 = vld [vmem:[%s304] sm:$0xff]
        %vm361 = vcmask 261120
        %v362 = vsel %vm361, %v360, 0.0
        %363 = vadd.xlane.f32.xlu0 %v362
        %v364 = vpop.xlane.xlu0 %363
        %v365 = vrcp.pop 32.0
        %v366 = vmul.f32 32.0, %v365
        %v367 = vsub.f32 1.0, %v366
        %v368 = vmul.f32 %v365, %v367
        %v369 = vadd.f32 %v365, %v368
        %vm370 = vweird.f32 %v365
        %v371 = vsel %vm370, %v365, %v369
        %v372 = vmul.f32 %v364, %v371
        %v373 = vsub.f32 %v360, %v372
        %v374 = vmul.f32 %v373, %v373
        %v375 = vsel %vm361, %v374, 0.0
        %376 = vadd.xlane.f32.xlu0 %v375
        %v377 = vpop.xlane.xlu0 %376
        %v378 = vmul.f32 %v377, %v371
        %v379 = vadd.f32 %v378, 1e-05
        %v380 = vrsqrt.pop %v379
        %v381 = vmul.f32 %v380, %v379
        %v382 = vmul.f32 %v381, %v380
        %v383 = vmul.f32 0.5, %v382
        %v384 = vsub.f32 1.5, %v383
        %v385 = vmul.f32 %v380, %v384
        %vm386 = vweird.f32 %v379
        %vm387 = vweird.f32 %v380
        %vm388 = vmor %vm386, %vm387
        %v389 = vsel %vm388, %v380, %v385
        %v390 = vmul.f32 %v373, %v389
        %v391 = vpack.c.bf16 %v390, %v390
        %v392 = vld [vmem:[#allocation5] sm:$0xf]
        %v393 = vld [vmem:[#allocation5 + $0x4] sm:$0xf]
        %v394 = vld [vmem:[#allocation5 + $0x8] sm:$0xf]
        %v395 = vld [vmem:[#allocation5 + $0xc] sm:$0xf]
        %v400 = vunpack.c.l.b16 %v392
        %v401 = vunpack.c.l.b16 %v393
        %v402 = vunpack.c.l.b16 %v394
        %v403 = vunpack.c.l.b16 %v395
        %v404 = vpack.c.b16 %v401, %v400
        %v405 = vpack.c.b16 %v403, %v402
        %v409 = vsel %vm361, %v391, 0
        %411 = vmatpush.bf16.msra.mxu0 0
        %412 = vmatpush.bf16.msra.mxu0 0
        %413 = vmatpush.bf16.msra.mxu0 0
        %414 = vmatpush.bf16.msra.mxu0 0
        %415 = vmatpush.bf16.msra.mxu0 0
        %416 = vmatpush.bf16.msra.mxu0 0
        %417 = vmatpush.bf16.msra.mxu0 %v405
        %418 = vmatpush.bf16.msra.mxu0 %v404
        %419 = vmatmul.bf16.gmra.mxu0 %v409
        %v420 = vpop.f32.mrf.mxu0
        %v421 = vadd.f32 0.0, %v420
        %v422 = vpop.f32.mrf.mxu0
        %423 = vdwg.mxu0
        %v424 = vpack.c.bf16 %v421, %v421
        %vm425 = vcmask 257024
        %426 = vst.msk [vmem:[%s344] sm:$0xf] %vm425, %v424
        %v427 = vld [vmem:[#allocation7] sm:$0xf]
        %v428 = vld [vmem:[#allocation7 + $0x4] sm:$0xf]
        %v429 = vld [vmem:[#allocation7 + $0x8] sm:$0xf]
        %v430 = vld [vmem:[#allocation7 + $0xc] sm:$0xf]
        %v435 = vunpack.c.l.b16 %v427
        %v436 = vunpack.c.l.b16 %v428
        %v437 = vunpack.c.l.b16 %v429
        %v438 = vunpack.c.l.b16 %v430
        %v439 = vpack.c.b16 %v436, %v435
        %v440 = vpack.c.b16 %v438, %v437
        %443 = vmatpush.bf16.msra.mxu0 0
        %444 = vmatpush.bf16.msra.mxu0 0
        %445 = vmatpush.bf16.msra.mxu0 0
        %446 = vmatpush.bf16.msra.mxu0 0
        %447 = vmatpush.bf16.msra.mxu0 0
        %448 = vmatpush.bf16.msra.mxu0 0
        %449 = vmatpush.bf16.msra.mxu0 %v440
        %450 = vmatpush.bf16.msra.mxu0 %v439
        %451 = vmatmul.bf16.gmra.mxu0 %v409
        %v452 = vpop.f32.mrf.mxu0
        %v453 = vadd.f32 0.0, %v452
        %v454 = vpop.f32.mrf.mxu0
        %455 = vdwg.mxu0
        %v456 = vpack.c.bf16 %v453, %v453
        %457 = vst.msk [vmem:[%s351] sm:$0xf] %vm425, %v456
        %v458 = vld [vmem:[#allocation8] sm:$0xf]
        %v459 = vld [vmem:[#allocation8 + $0x4] sm:$0xf]
        %v460 = vld [vmem:[#allocation8 + $0x8] sm:$0xf]
        %v461 = vld [vmem:[#allocation8 + $0xc] sm:$0xf]
        %v466 = vunpack.c.l.b16 %v458
        %v467 = vunpack.c.l.b16 %v459
        %v468 = vunpack.c.l.b16 %v460
        %v469 = vunpack.c.l.b16 %v461
        %v470 = vpack.c.b16 %v467, %v466
        %v471 = vpack.c.b16 %v469, %v468
        %474 = vmatpush.bf16.msra.mxu0 0
        %475 = vmatpush.bf16.msra.mxu0 0
        %476 = vmatpush.bf16.msra.mxu0 0
        %477 = vmatpush.bf16.msra.mxu0 0
        %478 = vmatpush.bf16.msra.mxu0 0
        %479 = vmatpush.bf16.msra.mxu0 0
        %480 = vmatpush.bf16.msra.mxu0 %v471
        %481 = vmatpush.bf16.msra.mxu0 %v470
        %482 = vmatmul.bf16.gmra.mxu0 %v409
        %v483 = vpop.f32.mrf.mxu0
        %v484 = vadd.f32 0.0, %v483
        %v485 = vpop.f32.mrf.mxu0
        %486 = vdwg.mxu0
        %v487 = vpack.c.bf16 %v484, %v484
        %488 = vst.msk [vmem:[%s358] sm:$0xf] %vm425, %v487
        %s489 = sand.u32 %s142, 1
        %s490 = scalar_lea.sflag [#allocation4], %s489
        %s491 = sand.u32 %s142, 1
        %s492 = smul.addr %s491, 4
        %s493 = scalar_lea.vmem [#allocation10], %s492
        %s494 = sand.u32 %s29, 1
        %s495 = scalar_lea.sflag [#allocation12], %s494
        %s496 = sand.u32 %s170, 1
        %s497 = smul.addr %s496, 4
        %s498 = scalar_lea.vmem [#allocation11], %s497
        %s499 = sand.u32 %s29, 1
        %s500 = scalar_lea.sflag [#allocation12], %s499
        %s501 = sand.u32 %s198, 1
        %s502 = smul.addr %s501, 4
        %s503 = scalar_lea.vmem [#allocation13], %s502
        // Predicated region
        $region53: #{tpu_custom_call.1} parent=35 // pred_check
          %p504 = pneg %p152
        $region54: #{tpu_custom_call.1} parent=35 // pred_check_branch
          %506 = sbr.rel (%p504) target = $region56
        $region55: #{tpu_custom_call.1} parent=35 // pred_region
          %508 = vsyncadd %s490, 0
          %s509 = smul.addr %s33, 2
          %s510 = sadd.s32 %s34, %s509
          %s511 = smul.addr %s510, 4
          %s512 = scalar_lea.hbm %s4, %s511
          %s514 = sshll.u32 %s493, 4
          %s515 = int_to_ptr.vmem [resolvable:$true] %s514
          %s516 = sshll.u32 %s512, 4
          %s517 = int_to_ptr.hbm [resolvable:$true] %s516
          %519 = dma.vmem_to_hbm [thread:$0]  %s515, 64, %s517, %s490
        $region56: #{tpu_custom_call.1} parent=35 // pred_fallthru
          _
        // Predicated region
        $region57: #{tpu_custom_call.1} parent=35 // pred_check
          %p520 = pneg %p180
        $region58: #{tpu_custom_call.1} parent=35 // pred_check_branch
          %522 = sbr.rel (%p520) target = $region60
        $region59: #{tpu_custom_call.1} parent=35 // pred_region
          %524 = vsyncadd %s495, 0
          %s525 = smul.addr %s33, 2
          %s526 = sadd.s32 %s34, %s525
          %s527 = smul.addr %s526, 4
          %s528 = scalar_lea.hbm %s5, %s527
          %s530 = sshll.u32 %s498, 4
          %s531 = int_to_ptr.vmem [resolvable:$true] %s530
          %s532 = sshll.u32 %s528, 4
          %s533 = int_to_ptr.hbm [resolvable:$true] %s532
          %535 = dma.vmem_to_hbm [thread:$0]  %s531, 64, %s533, %s495
        $region60: #{tpu_custom_call.1} parent=35 // pred_fallthru
          _
        // Predicated region
        $region61: #{tpu_custom_call.1} parent=35 // pred_check
          %p536 = pneg %p208
        $region62: #{tpu_custom_call.1} parent=35 // pred_check_branch
          %538 = sbr.rel (%p536) target = $region64
        $region63: #{tpu_custom_call.1} parent=35 // pred_region
          %540 = vsyncadd %s500, 0
          %s541 = smul.addr %s33, 2
          %s542 = sadd.s32 %s34, %s541
          %s543 = smul.addr %s542, 4
          %s544 = scalar_lea.hbm %s6, %s543
          %s546 = sshll.u32 %s503, 4
          %s547 = int_to_ptr.vmem [resolvable:$true] %s546
          %s548 = sshll.u32 %s544, 4
          %s549 = int_to_ptr.hbm [resolvable:$true] %s548
          %551 = dma.vmem_to_hbm [thread:$0]  %s547, 64, %s549, %s500
        $region64: #{tpu_custom_call.1} parent=35 // pred_fallthru
          _
      $region36: #{tpu_custom_call.1} parent=5 // pred_fallthru
        _
      %p552 = scmp.le.s32.totalorder 2, %s24
      // Predicated region
      $region65: #{tpu_custom_call.1} parent=5 // pred_check
        %p553 = pneg %p552
      $region66: #{tpu_custom_call.1} parent=5 // pred_check_branch
        %555 = sbr.rel (%p553) target = $region68
      $region67: #{tpu_custom_call.1} parent=5 // pred_region
        %s556 = ssub.s32 %s24, 2
        // Predicated region
        $region69: #{tpu_custom_call.1} parent=67 // pred_check
          %p557 = pneg %p158
        $region70: #{tpu_custom_call.1} parent=67 // pred_check_branch
          %559 = sbr.rel (%p557) target = $region72
        $region71: #{tpu_custom_call.1} parent=67 // pred_region
          %s560 = sand.u32 %s143, 1
          %s561 = scalar_lea.sflag [#allocation4], %s560
          %s562 = sand.u32 %s143, 1
          %s563 = smul.addr %s562, 4
          %s564 = scalar_lea.vmem [#allocation10], %s563
          %566 = dma.done %s561, 64
        $region72: #{tpu_custom_call.1} parent=67 // pred_fallthru
          _
        // Predicated region
        $region73: #{tpu_custom_call.1} parent=67 // pred_check
          %p567 = pneg %p186
        $region74: #{tpu_custom_call.1} parent=67 // pred_check_branch
          %569 = sbr.rel (%p567) target = $region76
        $region75: #{tpu_custom_call.1} parent=67 // pred_region
          %s570 = sand.u32 %s30, 1
          %s571 = scalar_lea.sflag [#allocation12], %s570
          %s572 = sand.u32 %s171, 1
          %s573 = smul.addr %s572, 4
          %s574 = scalar_lea.vmem [#allocation11], %s573
          %576 = dma.done %s571, 64
        $region76: #{tpu_custom_call.1} parent=67 // pred_fallthru
          _
        // Predicated region
        $region77: #{tpu_custom_call.1} parent=67 // pred_check
          %p577 = pneg %p214
        $region78: #{tpu_custom_call.1} parent=67 // pred_check_branch
          %579 = sbr.rel (%p577) target = $region80
        $region79: #{tpu_custom_call.1} parent=67 // pred_region
          %s580 = sand.u32 %s30, 1
          %s581 = scalar_lea.sflag [#allocation12], %s580
          %s582 = sand.u32 %s199, 1
          %s583 = smul.addr %s582, 4
          %s584 = scalar_lea.vmem [#allocation13], %s583
          %586 = dma.done %s581, 64
        $region80: #{tpu_custom_call.1} parent=67 // pred_fallthru
          _
      $region68: #{tpu_custom_call.1} parent=5 // pred_fallthru
        _
    $region6: #{tpu_custom_call.1} parent=1 // loop_footer
      %s28 = sadd.s32 1, %s24
    $region7: #{tpu_custom_call.1} parent=1 // loop_footer_branch
      %23 = sbr.rel target = $region3
    $region8: #{tpu_custom_call.1} parent=1 // loop_exit
      _
    %587 = vsyncpa [#allocation3], 1
    %s588 = scalar_lea.sflag [#allocation3], 1
    %589 = vsyncpa %s588, 1
    %590 = vsyncpa [#allocation6], 1
    %591 = vsyncpa [#allocation9], 1
    %592 = vsyncpa [#allocation4], 1
    %s593 = scalar_lea.sflag [#allocation4], 1
    %594 = vsyncpa %s593, 1
    %595 = vsyncpa [#allocation12], 1
    %s596 = scalar_lea.sflag [#allocation12], 1
    %597 = vsyncpa %s596, 1

</llo_original>
